<compile_context>
chip_gen: v6e
topology: v6e:2x2x1
jax: 0.10.0
libtpu: 0.0.40
codegen_flags: <defaults>
</compile_context>

<pallas_src>
import jax
import jax.numpy as jnp
from jax.experimental import pallas as pl
from jax.experimental.pallas import tpu as pltpu

_LANES = 128
_BN_EPS = 1e-5


# ---------------------------------------------------------------------------
# C_in == C_out : identity passthrough (copy kernel)
# ---------------------------------------------------------------------------
def _copy_kernel(x_ref, o_ref):
    o_ref[...] = x_ref[...]


def _identity_copy(x: jax.Array) -> jax.Array:
    """Lane-dense tiled copy of x (explicit materialization of Identity)."""
    cost = pl.CostEstimate(flops=0, transcendentals=0,
                           bytes_accessed=2 * x.nbytes)
    itemsize = jnp.dtype(x.dtype).itemsize
    compiler_params = pltpu.CompilerParams(dimension_semantics=("parallel",))

    if x.size % _LANES == 0:
        # Flatten to a lane-dense 2-D slab: last dim = 128 lanes (full,
        # unmasked vst on the bulk blocks), ~2 MiB per block so the
        # ~0.35 us/step grid overhead is amortized (~86%+ of HBM roofline),
        # while input+output double-buffering (4 live buffers = 8 MiB) stays
        # under v5e's 16 MiB scoped-VMEM default.
        rows = x.size // _LANES
        target_rows = (2 * 1024 * 1024) // (_LANES * itemsize)  # dtype-aware
        block_rows = min(rows, target_rows)   # either full-extent or 8k-aligned
        grid = pl.cdiv(rows, block_rows)      # ragged last block is masked
        x2 = x.reshape(rows, _LANES)
        out = pl.pallas_call(
            _copy_kernel,
            out_shape=jax.ShapeDtypeStruct((rows, _LANES), x.dtype),
            grid_spec=pl.GridSpec(
                grid=(grid,),
                in_specs=[pl.BlockSpec((block_rows, _LANES), lambda i: (i, 0))],
                out_specs=pl.BlockSpec((block_rows, _LANES), lambda i: (i, 0)),
            ),
            compiler_params=compiler_params,
            cost_estimate=cost,
        )(x2)
        return out.reshape(x.shape)

    # Fallback (x.size not a multiple of 128): lane-dense (1, 1, C*H*W) blocks,
    # one batch element per grid step.  The last two block dims equal the full
    # array dims, so the (8, 128) divisibility rule does not apply.
    n = x.shape[0]
    flat = x.size // n
    x3 = x.reshape(n, 1, flat)
    out = pl.pallas_call(
        _copy_kernel,
        out_shape=jax.ShapeDtypeStruct((n, 1, flat), x.dtype),
        grid_spec=pl.GridSpec(
            grid=(n,),
            in_specs=[pl.BlockSpec((1, 1, flat), lambda i: (i, 0, 0))],
            out_specs=pl.BlockSpec((1, 1, flat), lambda i: (i, 0, 0)),
        ),
        compiler_params=compiler_params,
        cost_estimate=cost,
    )(x3)
    return out.reshape(x.shape)


# ---------------------------------------------------------------------------
# C_in != C_out : ReLU -> 1x1 Conv (no bias) -> BatchNorm2d(affine=False)
# ---------------------------------------------------------------------------
def _relu_conv1x1_bn(x: jax.Array, w: jax.Array) -> jax.Array:
    n, c_in, h, wd = x.shape
    c_out = w.shape[0]
    hw = h * wd
    inv_m = 1.0 / float(n * hw)           # BN reduces over all of N*H*W

    def kernel(x_ref, w_ref, o_ref, sum_ref, ssq_ref):
        # Grid (phase, batch).  Phase 0: accumulate per-channel sum / sumsq of
        # y = w @ relu(x_n) (global BN statistics).  Phase 1: recompute y and
        # normalize.  The op is memory-bound, so the second tiny matmul is
        # cheaper than staging un-normalized y through HBM.
        phase = pl.program_id(0)
        bi = pl.program_id(1)

        @pl.when(jnp.logical_and(phase == 0, bi == 0))
        def _init():
            sum_ref[...] = jnp.zeros_like(sum_ref)
            ssq_ref[...] = jnp.zeros_like(ssq_ref)

        xr = jnp.maximum(x_ref[0], 0.0).astype(jnp.float32)      # (C_in, HW)
        wf = w_ref[...].astype(jnp.float32)                       # (C_out, C_in)
        y = jnp.dot(wf, xr, preferred_element_type=jnp.float32,
                    precision=jax.lax.Precision.HIGHEST)          # (C_out, HW)

        @pl.when(phase == 0)
        def _accumulate_stats():
            sum_ref[...] += jnp.sum(y, axis=1, keepdims=True)
            ssq_ref[...] += jnp.sum(y * y, axis=1, keepdims=True)

        @pl.when(phase == 1)
        def _normalize():
            mean = sum_ref[...] * inv_m
            var = jnp.maximum(ssq_ref[...] * inv_m - mean * mean, 0.0)
            o_ref[0] = ((y - mean) * jax.lax.rsqrt(var + _BN_EPS)).astype(o_ref.dtype)

    # Free reshape only (no HBM transpose passes): channels on sublanes,
    # fused H*W axis on lanes -> lane-dense output stores.
    x3 = x.reshape(n, c_in, hw)
    # TODO(synk): very large H*W per batch element would additionally need
    # lane-axis tiling (with tail masking inside the BN reduction).
    y3 = pl.pallas_call(
        kernel,
        out_shape=jax.ShapeDtypeStruct((n, c_out, hw), x.dtype),
        grid_spec=pltpu.PrefetchScalarGridSpec(
            num_scalar_prefetch=0,
            grid=(2, n),
            in_specs=[
                pl.BlockSpec((1, c_in, hw), lambda p, i: (i, 0, 0)),
                pl.BlockSpec((c_out, c_in), lambda p, i: (0, 0)),  # resident
            ],
            # Phase 0: constant block index -> output stays resident, no HBM
            # writeback of un-normalized data.  Phase 1: one block per batch.
            out_specs=pl.BlockSpec((1, c_out, hw), lambda p, i: (p * i, 0, 0)),
            scratch_shapes=[pltpu.VMEM((c_out, 1), jnp.float32),   # sum
                            pltpu.VMEM((c_out, 1), jnp.float32)],  # sum of sq
        ),
        compiler_params=pltpu.CompilerParams(
            dimension_semantics=("arbitrary", "arbitrary")),
        cost_estimate=pl.CostEstimate(
            flops=4 * c_out * c_in * n * hw + 10 * c_out * n * hw,
            transcendentals=0,
            bytes_accessed=2 * x3.nbytes + 2 * w.nbytes
            + n * c_out * hw * jnp.dtype(x.dtype).itemsize),
    )(x3, w)
    return y3.reshape(n, c_out, h, wd)


# ---------------------------------------------------------------------------
# Module-level forward
# ---------------------------------------------------------------------------
def identity_forward(x: jax.Array, c_in: int, c_out: int,
                     conv_weight: jax.Array | None = None,
                     materialize: bool = True) -> jax.Array:
    """Forward of `Identity(C_in, C_out)`.

    conv_weight has shape (C_out, C_in) (the 1x1 Conv2d weight with the
    trailing 1x1 dims squeezed).  For C_in == C_out, `materialize=False`
    returns x directly (the true zero-cost identity); the default runs the
    explicit Pallas copy kernel.
    """
    if c_in == c_out:
        if not materialize:
            return x
        return _identity_copy(x)
    assert conv_weight is not None and conv_weight.shape == (c_out, c_in)
    return _relu_conv1x1_bn(x, conv_weight)


if __name__ == "__main__":
    key = jax.random.PRNGKey(0)
    k1, k2 = jax.random.split(key)

    # NCHW input: batch=2, channels=4, spatial=16x16.
    x = jax.random.normal(k1, (2, 4, 16, 16), dtype=jnp.float32)

    # --- C_in == C_out : pure passthrough ---------------------------------
    y_id = identity_forward(x, c_in=4, c_out=4)
    jax.block_until_ready(y_id)
    assert y_id.shape == x.shape and y_id.dtype == x.dtype
    assert bool(jnp.array_equal(y_id, x))

    # --- C_in != C_out : ReLU -> 1x1 conv -> BatchNorm(affine=False) ------
    c_out = 8
    # kaiming_normal-style init for the 1x1 conv weight (fan_in = C_in).
    w = jax.random.normal(k2, (c_out, 4), dtype=jnp.float32) * jnp.sqrt(2.0 / 4.0)
    y_proj = identity_forward(x, c_in=4, c_out=c_out, conv_weight=w)
    jax.block_until_ready(y_proj)

    # Pure-JAX reference.
    xr = jnp.maximum(x, 0.0)
    ref = jnp.einsum("oc,nchw->nohw", w, xr,
                     precision=jax.lax.Precision.HIGHEST)
    mean = jnp.mean(ref, axis=(0, 2, 3), keepdims=True)
    var = jnp.mean(jnp.square(ref - mean), axis=(0, 2, 3), keepdims=True)
    ref = (ref - mean) * jax.lax.rsqrt(var + _BN_EPS)
    assert y_proj.shape == (2, c_out, 16, 16)
    assert bool(jnp.allclose(y_proj, ref, atol=5e-3, rtol=5e-3))

    print("KERNEL_OK")
</pallas_src>

<mosaic_0001>
module attributes {stable_mosaic.version = 11 : i64} {
  func.func @_copy_kernel(%arg0: i32, %arg1: memref<16x128xf32, #tpu.memory_space<vmem>>, %arg2: memref<16x128xf32, #tpu.memory_space<vmem>>) attributes {dimension_semantics = [#tpu.dimension_semantics<parallel>], iteration_bounds = array<i64: 1>, scalar_prefetch = 0 : i64, scratch_operands = 0 : i64, tpu.core_type = #tpu.core_type<tc>, window_params = [{transform_indices = @transform_0, window_bounds = array<i64: 16, 128>}, {transform_indices = @transform_1, window_bounds = array<i64: 16, 128>}]} {
    %c0 = arith.constant 0 : index
    %c0_0 = arith.constant 0 : index
    %0 = vector.load %arg1[%c0, %c0_0] : memref<16x128xf32, #tpu.memory_space<vmem>>, vector<16x128xf32>
    %c0_1 = arith.constant 0 : index
    %c0_2 = arith.constant 0 : index
    %1 = vector.load %arg2[%c0_1, %c0_2] : memref<16x128xf32, #tpu.memory_space<vmem>>, vector<16x128xf32>
    tpu.vector_store %arg2[%c0_1, %c0_2], %0 {strides = array<i32>} : memref<16x128xf32, #tpu.memory_space<vmem>>, vector<16x128xf32>,
    return
  }
  func.func @transform_0(%arg0: i32) -> (i32, i32) {
    %c0_i32 = arith.constant 0 : i32
    %c0_i32_0 = arith.constant 0 : i32
    return %arg0, %c0_i32 : i32, i32
  }
  func.func @transform_1(%arg0: i32) -> (i32, i32) {
    %c0_i32 = arith.constant 0 : i32
    %c0_i32_0 = arith.constant 0 : i32
    return %arg0, %c0_i32 : i32, i32
  }
}

</mosaic_0001>

<llo_original>
// kernel: tpu_custom_call.1
$region0: #{tpu_custom_call.1}
  #allocation0 [shape = 'u32[]', space=smem, size = 0x4, offset = 0x4, fixed_abs, tag = 'smem constant byte address 0x4 - core index']
  #allocation1 [shape = 'u32[144,128]{1,0:T(1,128)}', space=vmem, size = 0x12000, scoped, tag = 'internal scratch']
  %s0 = inlined_call_operand.hbm [shape: f32[16,128], index: 0, kind: input, shape index: {}]
  %s1 = inlined_call_operand.hbm [shape: f32[16,128], index: 1, kind: output, shape index: {}]
  %s2 = sld [smem:[#allocation0]]
  $region18: #{tpu_custom_call.1} parent=0
    _
  %s4 = ssub.s32 1, %s2
  %s5 = scalar_select 0, %s4, %s2
  $region1: #{tpu_custom_call.1} parent=0
    #allocation2 [shape = 'u8[8192]{0}', space=vmem, size = 0x2000, scoped, tag = 'input window, operand 0, single buffered']
    #allocation3 [shape = 's32[1]{0}', space=sflag, size = 0x4, scoped, tag = 'scoped memory for tpu_custom_call.1']
    #allocation4 [shape = 's32[1]{0}', space=sflag, size = 0x4, scoped, tag = 'scoped memory for tpu_custom_call.1']
    #allocation5 [shape = 'u8[8192]{0}', space=vmem, size = 0x2000, scoped, tag = 'output window, operand 0, single buffered']
    %6 = vsyncpa [#allocation3], 0
    %7 = vsyncpa [#allocation4], 0
    // Predicated region
    $region2: #{tpu_custom_call.1} parent=1 // pred_check
      _
    $region3: #{tpu_custom_call.1} parent=1 // pred_check_branch
      %9 = sbr.rel (0) target = $region5
    $region4: #{tpu_custom_call.1} parent=1 // pred_region
      %s11 = ssub.s32 256, 256
      %12 = vsyncadd [#allocation3], %s11
      %s13 = sshll.u32 [#allocation2], 4
      %s14 = int_to_ptr.vmem [resolvable:$true] %s13
      %19 = dma.hbm_to_vmem [thread:$0]  %s0, 256, %s14, [#allocation3], 128, 128, 8
    $region5: #{tpu_custom_call.1} parent=1 // pred_fallthru
      _
    // Predicated region
    $region6: #{tpu_custom_call.1} parent=1 // pred_check
      _
    $region7: #{tpu_custom_call.1} parent=1 // pred_check_branch
      %21 = sbr.rel (0) target = $region9
    $region8: #{tpu_custom_call.1} parent=1 // pred_region
      %22 = dma.done [#allocation3], 256
    $region9: #{tpu_custom_call.1} parent=1 // pred_fallthru
      _
    %v23 = vld [vmem:[#allocation2] sm:$0xff]
    %v24 = vld [vmem:[#allocation2 + $0x8] sm:$0xff]
    %25 = vst [vmem:[#allocation5] sm:$0xff] %v23
    %26 = vst [vmem:[#allocation5 + $0x8] sm:$0xff] %v24
    // Predicated region
    $region10: #{tpu_custom_call.1} parent=1 // pred_check
      _
    $region11: #{tpu_custom_call.1} parent=1 // pred_check_branch
      %28 = sbr.rel (0) target = $region13
    $region12: #{tpu_custom_call.1} parent=1 // pred_region
      %s30 = ssub.s32 256, 256
      %31 = vsyncadd [#allocation4], %s30
      %s32 = sshll.u32 [#allocation5], 4
      %s33 = int_to_ptr.vmem [resolvable:$true] %s32
      %38 = dma.vmem_to_hbm [thread:$0]  %s33, 256, %s1, [#allocation4], 128, 128, 8
    $region13: #{tpu_custom_call.1} parent=1 // pred_fallthru
      _
    // Predicated region
    $region14: #{tpu_custom_call.1} parent=1 // pred_check
      _
    $region15: #{tpu_custom_call.1} parent=1 // pred_check_branch
      %40 = sbr.rel (0) target = $region17
    $region16: #{tpu_custom_call.1} parent=1 // pred_region
      %41 = dma.done [#allocation4], 256
    $region17: #{tpu_custom_call.1} parent=1 // pred_fallthru
      _
    %42 = vsyncpa [#allocation3], 1
    %43 = vsyncpa [#allocation4], 1

</llo_original>
